<compile_context>
chip_gen: v7x
topology: tpu7x:2x2x1
jax: 0.10.0
libtpu: 0.0.40
codegen_flags: <defaults>
</compile_context>

<pallas_src>
import numpy as np
import jax
import jax.numpy as jnp
from jax.experimental import pallas as pl
from jax.experimental.pallas import tpu as pltpu

NUM_CLASSES = 3  # NUM_CLASSES is a free global in the reference module; fixed here.
BOXES_PER_LOCATION = [6, 6, 6, 6, 4, 4]
INPUT_CHANNELS = [256, 12, 24, 48, 96, 192]
FEATURE_LENGTHS = [16, 16, 8, 8, 8, 8]  # small 1-D "spatial" extents per level
BATCH = 2

NUM_LEVELS = len(BOXES_PER_LOCATION)
CP = max(INPUT_CHANNELS)                       # 256: common padded channel dim
LMAX = max(FEATURE_LENGTHS)                    # 16:  common padded length
OC_CLS = [b * NUM_CLASSES for b in BOXES_PER_LOCATION]   # [18,18,18,18,12,12]
OC_REG = [b * 2 for b in BOXES_PER_LOCATION]             # [12,12,12,12, 8, 8]
OCP = 32                                       # fused OC (max 30) padded to x8


# ----------------------------- Pallas kernel --------------------------------
def predictor_level_kernel(x_ref, w_ref, b_ref, o_ref):
    """Fused cls+reg Conv1d (k=3, stride=1, padding=1) for one level, full batch.

    x_ref: (1, B, CP, LMAX+2)  zero-padded input, NCW layout
    w_ref: (1, 3, OCP, CP)     per-tap fused (cls;reg) weight matrices
    b_ref: (1, OCP, 1)         fused bias (column vector)
    o_ref: (B, 1, OCP, LMAX)   fused output in (OC, L) = torch flatten order
    """
    B = o_ref.shape[0]
    ocp, L = o_ref.shape[2], o_ref.shape[3]
    # Hoisted bias broadcast: accumulator starts at bias (no separate add).
    bias = jnp.broadcast_to(b_ref[0], (ocp, L)).astype(jnp.float32)
    for b in range(B):                          # static unroll, B is tiny
        xb = x_ref[0, b]                        # (CP, LMAX+2)
        acc = bias
        for k in range(3):                      # static unroll over taps
            acc = acc + jnp.dot(w_ref[0, k], xb[:, k:k + L],
                                preferred_element_type=jnp.float32)
        o_ref[b, 0] = acc.astype(o_ref.dtype)


def predictor_fused_call(x_all, w_all, b_all):
    """x_all: (NL, B, CP, LMAX+2); w_all: (NL, 3, OCP, CP); b_all: (NL, OCP, 1)."""
    B = x_all.shape[1]
    return pl.pallas_call(
        predictor_level_kernel,
        out_shape=jax.ShapeDtypeStruct((B, NUM_LEVELS, OCP, LMAX), jnp.float32),
        grid_spec=pltpu.PrefetchScalarGridSpec(
            num_scalar_prefetch=0,
            grid=(NUM_LEVELS,),
            in_specs=[
                pl.BlockSpec((1, B, CP, LMAX + 2), lambda i: (i, 0, 0, 0)),
                pl.BlockSpec((1, 3, OCP, CP), lambda i: (i, 0, 0, 0)),
                pl.BlockSpec((1, OCP, 1), lambda i: (i, 0, 0)),
            ],
            out_specs=pl.BlockSpec((B, 1, OCP, LMAX), lambda i: (0, i, 0, 0)),
        ),
        compiler_params=pltpu.CompilerParams(
            dimension_semantics=("parallel",)),   # levels are independent work
    )(x_all, w_all, b_all)


# ------------------------- parameter initialization -------------------------
def xavier_uniform(key, oc, ic, k):
    fan_in, fan_out = ic * k, oc * k
    bound = float(np.sqrt(6.0 / (fan_in + fan_out)))
    return jax.random.uniform(key, (oc, ic, k), jnp.float32, -bound, bound)


def init_predictor_params(key):
    params = []
    for boxes, c_in in zip(BOXES_PER_LOCATION, INPUT_CHANNELS):
        key, k_cls, k_reg = jax.random.split(key, 3)
        cls_oc = boxes * NUM_CLASSES
        reg_oc = boxes * 2
        cls_w = xavier_uniform(k_cls, cls_oc, c_in, 3)
        cls_b = jnp.zeros((cls_oc,), jnp.float32)
        reg_w = xavier_uniform(k_reg, reg_oc, c_in, 3)
        reg_b = jnp.zeros((reg_oc,), jnp.float32)
        params.append((cls_w, cls_b, reg_w, reg_b))
    return params


def build_gather_indices():
    """Flat indices into (NUM_LEVELS*OCP*LMAX) reproducing torch's cat/view order."""
    cls_idx, reg_idx = [], []
    for i, (oc_c, oc_r, L) in enumerate(zip(OC_CLS, OC_REG, FEATURE_LENGTHS)):
        base = i * OCP * LMAX
        for oc in range(oc_c):
            for l in range(L):
                cls_idx.append(base + oc * LMAX + l)
        for oc in range(oc_r):
            for l in range(L):
                reg_idx.append(base + (oc_c + oc) * LMAX + l)
    return (jnp.asarray(np.array(cls_idx, np.int32)),
            jnp.asarray(np.array(reg_idx, np.int32)))


def prepare_fused_params(params):
    """Fuse cls+reg weights per level, pad to (OCP, CP, 3), stack over levels."""
    w_list, b_list = [], []
    for (cw, cb, rw, rb) in params:
        w = jnp.concatenate([cw, rw], axis=0)            # (OCf, C, 3)
        b = jnp.concatenate([cb, rb], axis=0)            # (OCf,)
        ocf, c, _ = w.shape
        w = jnp.pad(w, ((0, OCP - ocf), (0, CP - c), (0, 0)))
        w = jnp.transpose(w, (2, 0, 1))                  # (3, OCP, CP)
        b = jnp.pad(b, (0, OCP - ocf)).reshape(OCP, 1)
        w_list.append(w)
        b_list.append(b)
    w_all = jnp.stack(w_list, axis=0)                    # (NL, 3, OCP, CP)
    b_all = jnp.stack(b_list, axis=0)                    # (NL, OCP, 1)
    cls_idx, reg_idx = build_gather_indices()
    return w_all, b_all, cls_idx, reg_idx


# ------------------------------- forward pass --------------------------------
def predictor_forward(features_ncw, fused):
    """features_ncw: list of (B, C_i, L_i) arrays (PyTorch NCW convention)."""
    w_all, b_all, cls_idx, reg_idx = fused
    B = features_ncw[0].shape[0]
    xs = []
    for x in features_ncw:
        _, C, L = x.shape
        # channel pad to CP, conv pad (1 left) + length pad to LMAX (+1 right zero)
        xs.append(jnp.pad(x, ((0, 0), (0, CP - C), (1, 1 + LMAX - L))))
    x_all = jnp.stack(xs, axis=0)                        # (NL, B, CP, LMAX+2)

    out = predictor_fused_call(x_all, w_all, b_all)      # (B, NL, OCP, LMAX)
    out_flat = out.reshape(B, -1)
    cls_logits = jnp.take(out_flat, cls_idx, axis=1).reshape(B, -1, NUM_CLASSES)
    bbox_pred = jnp.take(out_flat, reg_idx, axis=1).reshape(B, -1, 2)
    return cls_logits, bbox_pred


# ------------------------------ pure-JAX reference ---------------------------
def conv1d_ref(x_ncw, w, b):
    xp = jnp.pad(x_ncw, ((0, 0), (0, 0), (1, 1)))
    L = x_ncw.shape[2]
    out = sum(jnp.einsum('bcl,oc->bol', xp[:, :, k:k + L], w[:, :, k])
              for k in range(3))
    return out + b[None, :, None]


def predictor_forward_ref(features_ncw, params):
    B = features_ncw[0].shape[0]
    cls_flat, reg_flat = [], []
    for x, (cw, cb, rw, rb) in zip(features_ncw, params):
        cls_flat.append(conv1d_ref(x, cw, cb).reshape(B, -1))
        reg_flat.append(conv1d_ref(x, rw, rb).reshape(B, -1))
    cls_logits = jnp.concatenate(cls_flat, axis=1).reshape(B, -1, NUM_CLASSES)
    bbox_pred = jnp.concatenate(reg_flat, axis=1).reshape(B, -1, 2)
    return cls_logits, bbox_pred


if __name__ == "__main__":
    key = jax.random.PRNGKey(0)
    key, pkey = jax.random.split(key)
    params = init_predictor_params(pkey)
    fused = prepare_fused_params(params)

    features = []
    for c_in, L in zip(INPUT_CHANNELS, FEATURE_LENGTHS):
        key, fkey = jax.random.split(key)
        features.append(jax.random.normal(fkey, (BATCH, c_in, L), jnp.float32))

    cls_logits, bbox_pred = predictor_forward(features, fused)
    cls_logits = jax.block_until_ready(cls_logits)
    bbox_pred = jax.block_until_ready(bbox_pred)

    cls_ref, bbox_ref = predictor_forward_ref(features, params)
    np.testing.assert_allclose(np.asarray(cls_logits), np.asarray(cls_ref),
                               rtol=1e-5, atol=1e-5)
    np.testing.assert_allclose(np.asarray(bbox_pred), np.asarray(bbox_ref),
                               rtol=1e-5, atol=1e-5)

    total_cells = sum(FEATURE_LENGTHS[i] * BOXES_PER_LOCATION[i]
                      for i in range(len(FEATURE_LENGTHS)))
    assert cls_logits.shape == (BATCH, total_cells, NUM_CLASSES)
    assert bbox_pred.shape == (BATCH, total_cells, 2)

    print("KERNEL_OK")
</pallas_src>

<mosaic_0001>
module attributes {stable_mosaic.version = 11 : i64} {
  func.func @predictor_level_kernel(%arg0: i32, %arg1: memref<1x2x256x18xf32, #tpu.memory_space<vmem>>, %arg2: memref<1x3x32x256xf32, #tpu.memory_space<vmem>>, %arg3: memref<1x32x1xf32, #tpu.memory_space<vmem>>, %arg4: memref<2x1x32x16xf32, #tpu.memory_space<vmem>>) attributes {dimension_semantics = [#tpu.dimension_semantics<parallel>], iteration_bounds = array<i64: 6>, scalar_prefetch = 0 : i64, scratch_operands = 0 : i64, tpu.core_type = #tpu.core_type<tc>, window_params = [{transform_indices = @transform_0, window_bounds = array<i64: 1, 2, 256, 18>}, {transform_indices = @transform_1, window_bounds = array<i64: 1, 3, 32, 256>}, {transform_indices = @transform_2, window_bounds = array<i64: 1, 32, 1>}, {transform_indices = @transform_3, window_bounds = array<i64: 2, 1, 32, 16>}]} {
    %c0 = arith.constant 0 : index
    %c0_0 = arith.constant 0 : index
    %c0_1 = arith.constant 0 : index
    %0 = vector.load %arg3[%c0, %c0_0, %c0_1] : memref<1x32x1xf32, #tpu.memory_space<vmem>>, vector<1x32x1xf32>
    %1 = vector.shape_cast %0 : vector<1x32x1xf32> to vector<32x1xf32>
    %2 = vector.shape_cast %1 : vector<32x1xf32> to vector<32x1xf32>
    %3 = vector.broadcast %2 : vector<32x1xf32> to vector<32x16xf32>
    %c0_2 = arith.constant 0 : index
    %c0_3 = arith.constant 0 : index
    %c0_4 = arith.constant 0 : index
    %c0_5 = arith.constant 0 : index
    %4 = vector.load %arg1[%c0_2, %c0_3, %c0_4, %c0_5] : memref<1x2x256x18xf32, #tpu.memory_space<vmem>>, vector<1x1x256x18xf32>
    %5 = vector.shape_cast %4 : vector<1x1x256x18xf32> to vector<256x18xf32>
    %c0_6 = arith.constant 0 : index
    %c0_7 = arith.constant 0 : index
    %c0_8 = arith.constant 0 : index
    %c0_9 = arith.constant 0 : index
    %6 = vector.load %arg2[%c0_6, %c0_7, %c0_8, %c0_9] : memref<1x3x32x256xf32, #tpu.memory_space<vmem>>, vector<1x1x32x256xf32>
    %7 = vector.shape_cast %6 : vector<1x1x32x256xf32> to vector<32x256xf32>
    %8 = vector.extract_strided_slice %5 {offsets = [0, 0], sizes = [256, 16], strides = [1, 1]} : vector<256x18xf32> to vector<256x16xf32>
    %cst = arith.constant dense<0.000000e+00> : vector<32x16xf32>
    %9 = tpu.matmul %7, %8, %cst {dimension_numbers = #tpu.dot_dimension_numbers<[1], [0], [0], [1], [0, 0, 1, 1], [], []>} : vector<32x256xf32>, vector<256x16xf32>, vector<32x16xf32> -> vector<32x16xf32>
    %10 = arith.addf %3, %9 : vector<32x16xf32>
    %c0_10 = arith.constant 0 : index
    %c1 = arith.constant 1 : index
    %c0_11 = arith.constant 0 : index
    %c0_12 = arith.constant 0 : index
    %11 = vector.load %arg2[%c0_10, %c1, %c0_11, %c0_12] : memref<1x3x32x256xf32, #tpu.memory_space<vmem>>, vector<1x1x32x256xf32>
    %12 = vector.shape_cast %11 : vector<1x1x32x256xf32> to vector<32x256xf32>
    %13 = vector.extract_strided_slice %5 {offsets = [0, 1], sizes = [256, 16], strides = [1, 1]} : vector<256x18xf32> to vector<256x16xf32>
    %cst_13 = arith.constant dense<0.000000e+00> : vector<32x16xf32>
    %14 = tpu.matmul %12, %13, %cst_13 {dimension_numbers = #tpu.dot_dimension_numbers<[1], [0], [0], [1], [0, 0, 1, 1], [], []>} : vector<32x256xf32>, vector<256x16xf32>, vector<32x16xf32> -> vector<32x16xf32>
    %15 = arith.addf %10, %14 : vector<32x16xf32>
    %c0_14 = arith.constant 0 : index
    %c2 = arith.constant 2 : index
    %c0_15 = arith.constant 0 : index
    %c0_16 = arith.constant 0 : index
    %16 = vector.load %arg2[%c0_14, %c2, %c0_15, %c0_16] : memref<1x3x32x256xf32, #tpu.memory_space<vmem>>, vector<1x1x32x256xf32>
    %17 = vector.shape_cast %16 : vector<1x1x32x256xf32> to vector<32x256xf32>
    %18 = vector.extract_strided_slice %5 {offsets = [0, 2], sizes = [256, 16], strides = [1, 1]} : vector<256x18xf32> to vector<256x16xf32>
    %cst_17 = arith.constant dense<0.000000e+00> : vector<32x16xf32>
    %19 = tpu.matmul %17, %18, %cst_17 {dimension_numbers = #tpu.dot_dimension_numbers<[1], [0], [0], [1], [0, 0, 1, 1], [], []>} : vector<32x256xf32>, vector<256x16xf32>, vector<32x16xf32> -> vector<32x16xf32>
    %20 = arith.addf %15, %19 : vector<32x16xf32>
    %c0_18 = arith.constant 0 : index
    %c0_19 = arith.constant 0 : index
    %c0_20 = arith.constant 0 : index
    %c0_21 = arith.constant 0 : index
    %21 = vector.load %arg4[%c0_18, %c0_19, %c0_20, %c0_21] : memref<2x1x32x16xf32, #tpu.memory_space<vmem>>, vector<1x1x32x16xf32>
    %22 = vector.shape_cast %21 : vector<1x1x32x16xf32> to vector<32x16xf32>
    %23 = vector.shape_cast %20 : vector<32x16xf32> to vector<1x1x32x16xf32>
    tpu.vector_store %arg4[%c0_18, %c0_19, %c0_20, %c0_21], %23 {strides = array<i32>} : memref<2x1x32x16xf32, #tpu.memory_space<vmem>>, vector<1x1x32x16xf32>,
    %c0_22 = arith.constant 0 : index
    %c1_23 = arith.constant 1 : index
    %c0_24 = arith.constant 0 : index
    %c0_25 = arith.constant 0 : index
    %24 = vector.load %arg1[%c0_22, %c1_23, %c0_24, %c0_25] : memref<1x2x256x18xf32, #tpu.memory_space<vmem>>, vector<1x1x256x18xf32>
    %25 = vector.shape_cast %24 : vector<1x1x256x18xf32> to vector<256x18xf32>
    %c0_26 = arith.constant 0 : index
    %c0_27 = arith.constant 0 : index
    %c0_28 = arith.constant 0 : index
    %c0_29 = arith.constant 0 : index
    %26 = vector.load %arg2[%c0_26, %c0_27, %c0_28, %c0_29] : memref<1x3x32x256xf32, #tpu.memory_space<vmem>>, vector<1x1x32x256xf32>
    %27 = vector.shape_cast %26 : vector<1x1x32x256xf32> to vector<32x256xf32>
    %28 = vector.extract_strided_slice %25 {offsets = [0, 0], sizes = [256, 16], strides = [1, 1]} : vector<256x18xf32> to vector<256x16xf32>
    %cst_30 = arith.constant dense<0.000000e+00> : vector<32x16xf32>
    %29 = tpu.matmul %27, %28, %cst_30 {dimension_numbers = #tpu.dot_dimension_numbers<[1], [0], [0], [1], [0, 0, 1, 1], [], []>} : vector<32x256xf32>, vector<256x16xf32>, vector<32x16xf32> -> vector<32x16xf32>
    %30 = arith.addf %3, %29 : vector<32x16xf32>
    %c0_31 = arith.constant 0 : index
    %c1_32 = arith.constant 1 : index
    %c0_33 = arith.constant 0 : index
    %c0_34 = arith.constant 0 : index
    %31 = vector.load %arg2[%c0_31, %c1_32, %c0_33, %c0_34] : memref<1x3x32x256xf32, #tpu.memory_space<vmem>>, vector<1x1x32x256xf32>
    %32 = vector.shape_cast %31 : vector<1x1x32x256xf32> to vector<32x256xf32>
    %33 = vector.extract_strided_slice %25 {offsets = [0, 1], sizes = [256, 16], strides = [1, 1]} : vector<256x18xf32> to vector<256x16xf32>
    %cst_35 = arith.constant dense<0.000000e+00> : vector<32x16xf32>
    %34 = tpu.matmul %32, %33, %cst_35 {dimension_numbers = #tpu.dot_dimension_numbers<[1], [0], [0], [1], [0, 0, 1, 1], [], []>} : vector<32x256xf32>, vector<256x16xf32>, vector<32x16xf32> -> vector<32x16xf32>
    %35 = arith.addf %30, %34 : vector<32x16xf32>
    %c0_36 = arith.constant 0 : index
    %c2_37 = arith.constant 2 : index
    %c0_38 = arith.constant 0 : index
    %c0_39 = arith.constant 0 : index
    %36 = vector.load %arg2[%c0_36, %c2_37, %c0_38, %c0_39] : memref<1x3x32x256xf32, #tpu.memory_space<vmem>>, vector<1x1x32x256xf32>
    %37 = vector.shape_cast %36 : vector<1x1x32x256xf32> to vector<32x256xf32>
    %38 = vector.extract_strided_slice %25 {offsets = [0, 2], sizes = [256, 16], strides = [1, 1]} : vector<256x18xf32> to vector<256x16xf32>
    %cst_40 = arith.constant dense<0.000000e+00> : vector<32x16xf32>
    %39 = tpu.matmul %37, %38, %cst_40 {dimension_numbers = #tpu.dot_dimension_numbers<[1], [0], [0], [1], [0, 0, 1, 1], [], []>} : vector<32x256xf32>, vector<256x16xf32>, vector<32x16xf32> -> vector<32x16xf32>
    %40 = arith.addf %35, %39 : vector<32x16xf32>
    %c1_41 = arith.constant 1 : index
    %c0_42 = arith.constant 0 : index
    %c0_43 = arith.constant 0 : index
    %c0_44 = arith.constant 0 : index
    %41 = vector.load %arg4[%c1_41, %c0_42, %c0_43, %c0_44] : memref<2x1x32x16xf32, #tpu.memory_space<vmem>>, vector<1x1x32x16xf32>
    %42 = vector.shape_cast %41 : vector<1x1x32x16xf32> to vector<32x16xf32>
    %43 = vector.shape_cast %40 : vector<32x16xf32> to vector<1x1x32x16xf32>
    tpu.vector_store %arg4[%c1_41, %c0_42, %c0_43, %c0_44], %43 {strides = array<i32>} : memref<2x1x32x16xf32, #tpu.memory_space<vmem>>, vector<1x1x32x16xf32>,
    return
  }
  func.func @transform_0(%arg0: i32) -> (i32, i32, i32, i32) {
    %c0_i32 = arith.constant 0 : i32
    %c0_i32_0 = arith.constant 0 : i32
    %c0_i32_1 = arith.constant 0 : i32
    %c0_i32_2 = arith.constant 0 : i32
    return %arg0, %c0_i32, %c0_i32_0, %c0_i32_1 : i32, i32, i32, i32
  }
  func.func @transform_1(%arg0: i32) -> (i32, i32, i32, i32) {
    %c0_i32 = arith.constant 0 : i32
    %c0_i32_0 = arith.constant 0 : i32
    %c0_i32_1 = arith.constant 0 : i32
    %c0_i32_2 = arith.constant 0 : i32
    return %arg0, %c0_i32, %c0_i32_0, %c0_i32_1 : i32, i32, i32, i32
  }
  func.func @transform_2(%arg0: i32) -> (i32, i32, i32) {
    %c0_i32 = arith.constant 0 : i32
    %c0_i32_0 = arith.constant 0 : i32
    %c0_i32_1 = arith.constant 0 : i32
    return %arg0, %c0_i32, %c0_i32_0 : i32, i32, i32
  }
  func.func @transform_3(%arg0: i32) -> (i32, i32, i32, i32) {
    %c0_i32 = arith.constant 0 : i32
    %c0_i32_0 = arith.constant 0 : i32
    %c0_i32_1 = arith.constant 0 : i32
    %c0_i32_2 = arith.constant 0 : i32
    return %c0_i32, %arg0, %c0_i32_0, %c0_i32_1 : i32, i32, i32, i32
  }
}

</mosaic_0001>

<llo_original>
// kernel: tpu_custom_call.1
$region0: #{tpu_custom_call.1}
  #allocation0 [shape = 'u32[]', space=smem, size = 0x4, offset = 0x4, fixed_abs, tag = 'smem constant byte address 0x4 - core index']
  #allocation1 [shape = 'u32[144,128]{1,0:T(1,128)}', space=vmem, size = 0x12000, scoped, tag = 'internal scratch']
  %s0 = inlined_call_operand.vmem [shape: f32[6,2,256,18], index: 0, kind: input, shape index: {}]
  %s1 = inlined_call_operand.vmem [shape: f32[6,3,32,256], index: 1, kind: input, shape index: {}]
  %s2 = inlined_call_operand.vmem [shape: f32[6,32,1], index: 2, kind: input, shape index: {}]
  %s3 = inlined_call_operand.vmem [shape: f32[2,6,32,16], index: 3, kind: output, shape index: {}]
  %s4 = sld [smem:[#allocation0]]
  $region79: #{tpu_custom_call.1} parent=0
    _
  %s6 = ssub.s32 1, %s4
  %s7 = scalar_select 0, %s6, %s4
  $region1: #{tpu_custom_call.1} parent=0
    #allocation2 [shape = 'u8[65536]{0}', space=vmem, size = 0x10000, scoped, tag = 'output window, operand 0']
    loop: start=0, step=1, limit=8
    $region2: #{tpu_custom_call.1} parent=1 // loop_pre_header
      _
    $region3: #{tpu_custom_call.1} parent=1 // loop_header
      %s9 = sphi 0, %s13
      %p10 = scmp.ge.s32.totalorder %s9, 8
      %s19 = sphi 0, %s21
      %s22 = sphi 0, %s19
      %s23 = sphi 0, %s22
      %s39 = sphi 0, %s23
      %s45 = sphi 0, %s47
      %s48 = sphi 0, %s45
      %s49 = sphi 0, %s48
      %s65 = sphi 0, %s49
      %s71 = sphi 0, %s73
      %s74 = sphi 0, %s71
      %s75 = sphi 0, %s74
      %s91 = sphi 0, %s75
      %s97 = sphi 0, %s99
      %s100 = sphi 0, %s97
      %s101 = sphi 0, %s100
      %s117 = sphi 0, %s101
    $region4: #{tpu_custom_call.1} parent=1 // loop_header_branch
      %12 = sbr.rel (%p10) target = $region8
    $region5: #{tpu_custom_call.1} parent=1 // loop_body
      %s14 = ssub.s32 %s9, 1
      %s15 = ssub.s32 %s9, 2
      %s16 = sadd.s32 %s9, 1
      %s17 = ssub.s32 %s9, %s16
      %p18 = scmp.eq.s32.totalorder %s17, 0
      %s20 = sadd.s32 %s19, 1
      %s21 = scalar_select %p18, %s19, %s20
      %p24 = pneg %p18
      %p25 = scmp.eq.s32.totalorder %s9, 5
      %p26 = por %p24, %p25
      %p27 = scmp.ne.s32.totalorder %s19, %s22
      %p28 = scmp.eq.s32.totalorder %s9, 0
      %p29 = por %p27, %p28
      %p30 = scmp.ne.s32.totalorder %s19, %s22
      %p31 = scmp.eq.s32.totalorder %s14, 5
      %p32 = por %p30, %p31
      %p33 = scmp.ne.s32.totalorder %s22, %s23
      %p34 = scmp.eq.s32.totalorder %s14, 0
      %p35 = por %p33, %p34
      %p36 = scmp.ne.s32.totalorder %s22, %s23
      %p37 = scmp.eq.s32.totalorder %s15, 5
      %p38 = por %p36, %p37
      %p40 = scmp.ne.s32.totalorder %s23, %s39
      %p41 = scmp.eq.s32.totalorder %s15, 0
      %p42 = por %p40, %p41
      %s43 = ssub.s32 %s9, %s16
      %p44 = scmp.eq.s32.totalorder %s43, 0
      %s46 = sadd.s32 %s45, 1
      %s47 = scalar_select %p44, %s45, %s46
      %p50 = pneg %p44
      %p51 = scmp.eq.s32.totalorder %s9, 5
      %p52 = por %p50, %p51
      %p53 = scmp.ne.s32.totalorder %s45, %s48
      %p54 = scmp.eq.s32.totalorder %s9, 0
      %p55 = por %p53, %p54
      %p56 = scmp.ne.s32.totalorder %s45, %s48
      %p57 = scmp.eq.s32.totalorder %s14, 5
      %p58 = por %p56, %p57
      %p59 = scmp.ne.s32.totalorder %s48, %s49
      %p60 = scmp.eq.s32.totalorder %s14, 0
      %p61 = por %p59, %p60
      %p62 = scmp.ne.s32.totalorder %s48, %s49
      %p63 = scmp.eq.s32.totalorder %s15, 5
      %p64 = por %p62, %p63
      %p66 = scmp.ne.s32.totalorder %s49, %s65
      %p67 = scmp.eq.s32.totalorder %s15, 0
      %p68 = por %p66, %p67
      %s69 = ssub.s32 %s9, %s16
      %p70 = scmp.eq.s32.totalorder %s69, 0
      %s72 = sadd.s32 %s71, 1
      %s73 = scalar_select %p70, %s71, %s72
      %p76 = pneg %p70
      %p77 = scmp.eq.s32.totalorder %s9, 5
      %p78 = por %p76, %p77
      %p79 = scmp.ne.s32.totalorder %s71, %s74
      %p80 = scmp.eq.s32.totalorder %s9, 0
      %p81 = por %p79, %p80
      %p82 = scmp.ne.s32.totalorder %s71, %s74
      %p83 = scmp.eq.s32.totalorder %s14, 5
      %p84 = por %p82, %p83
      %p85 = scmp.ne.s32.totalorder %s74, %s75
      %p86 = scmp.eq.s32.totalorder %s14, 0
      %p87 = por %p85, %p86
      %p88 = scmp.ne.s32.totalorder %s74, %s75
      %p89 = scmp.eq.s32.totalorder %s15, 5
      %p90 = por %p88, %p89
      %p92 = scmp.ne.s32.totalorder %s75, %s91
      %p93 = scmp.eq.s32.totalorder %s15, 0
      %p94 = por %p92, %p93
      %s95 = ssub.s32 %s9, %s16
      %p96 = scmp.eq.s32.totalorder %s95, 0
      %s98 = sadd.s32 %s97, 1
      %s99 = scalar_select %p96, %s97, %s98
      %p102 = pneg %p96
      %p103 = scmp.eq.s32.totalorder %s9, 5
      %p104 = por %p102, %p103
      %p105 = scmp.ne.s32.totalorder %s97, %s100
      %p106 = scmp.eq.s32.totalorder %s9, 0
      %p107 = por %p105, %p106
      %p108 = scmp.ne.s32.totalorder %s97, %s100
      %p109 = scmp.eq.s32.totalorder %s14, 5
      %p110 = por %p108, %p109
      %p111 = scmp.ne.s32.totalorder %s100, %s101
      %p112 = scmp.eq.s32.totalorder %s14, 0
      %p113 = por %p111, %p112
      %p114 = scmp.ne.s32.totalorder %s100, %s101
      %p115 = scmp.eq.s32.totalorder %s15, 5
      %p116 = por %p114, %p115
      %p118 = scmp.ne.s32.totalorder %s101, %s117
      %p119 = scmp.eq.s32.totalorder %s15, 0
      %p120 = por %p118, %p119
      %p121 = scmp.le.s32.totalorder 1, %s9
      %p122 = scmp.lt.s32.totalorder %s9, 7
      %p123 = pnand %p121, %p122
      %p124 = pneg %p123
      // Predicated region
      $region9: #{tpu_custom_call.1} parent=5 // pred_check
        _
      $region10: #{tpu_custom_call.1} parent=5 // pred_check_branch
        %126 = sbr.rel (%p123) target = $region12
      $region11: #{tpu_custom_call.1} parent=5 // pred_region
        %s127 = ssub.s32 %s9, 1
      $region12: #{tpu_custom_call.1} parent=5 // pred_fallthru
        _
      %p128 = scmp.lt.s32.totalorder %s9, 6
      // Predicated region
      $region13: #{tpu_custom_call.1} parent=5 // pred_check
        %p129 = pneg %p128
      $region14: #{tpu_custom_call.1} parent=5 // pred_check_branch
        %131 = sbr.rel (%p129) target = $region16
      $region15: #{tpu_custom_call.1} parent=5 // pred_region
        // Predicated region
        $region17: #{tpu_custom_call.1} parent=15 // pred_check
          %p132 = pneg %p29
        $region18: #{tpu_custom_call.1} parent=15 // pred_check_branch
          %134 = sbr.rel (%p132) target = $region20
        $region19: #{tpu_custom_call.1} parent=15 // pred_region
          %p135 = scmp.lt.s32.totalorder %s9, 5
          %s136 = scalar_select %p135, %s9, 5
          %s137 = smul.addr %s136, 64
          %s138 = smul.addr %s137, 8
          %s139 = scalar_lea.vmem %s0, %s138
        $region20: #{tpu_custom_call.1} parent=15 // pred_fallthru
          _
        // Predicated region
        $region21: #{tpu_custom_call.1} parent=15 // pred_check
          %p140 = pneg %p55
        $region22: #{tpu_custom_call.1} parent=15 // pred_check_branch
          %142 = sbr.rel (%p140) target = $region24
        $region23: #{tpu_custom_call.1} parent=15 // pred_region
          %p143 = scmp.lt.s32.totalorder %s9, 5
          %s144 = scalar_select %p143, %s9, 5
          %s145 = smul.addr %s144, 24
          %s146 = smul.addr %s145, 8
          %s147 = scalar_lea.vmem %s1, %s146
        $region24: #{tpu_custom_call.1} parent=15 // pred_fallthru
          _
        // Predicated region
        $region25: #{tpu_custom_call.1} parent=15 // pred_check
          %p148 = pneg %p81
        $region26: #{tpu_custom_call.1} parent=15 // pred_check_branch
          %150 = sbr.rel (%p148) target = $region28
        $region27: #{tpu_custom_call.1} parent=15 // pred_region
          %p151 = scmp.lt.s32.totalorder %s9, 5
          %s152 = scalar_select %p151, %s9, 5
          %s153 = smul.addr %s152, 4
          %s154 = smul.addr %s153, 8
          %s155 = scalar_lea.vmem %s2, %s154
        $region28: #{tpu_custom_call.1} parent=15 // pred_fallthru
          _
      $region16: #{tpu_custom_call.1} parent=5 // pred_fallthru
        _
      %p156 = scmp.le.s32.totalorder 1, %s9
      %p157 = scmp.lt.s32.totalorder %s9, 7
      %p158 = pnand %p156, %p157
      %p159 = pneg %p158
      // Predicated region
      $region29: #{tpu_custom_call.1} parent=5 // pred_check
        _
      $region30: #{tpu_custom_call.1} parent=5 // pred_check_branch
        %161 = sbr.rel (%p158) target = $region32
      $region31: #{tpu_custom_call.1} parent=5 // pred_region
        %s162 = ssub.s32 %s9, 1
        %p163 = scmp.lt.s32.totalorder %s14, 5
        %s164 = scalar_select %p163, %s14, 5
        %s165 = smul.addr %s164, 64
        %s166 = smul.addr %s165, 8
        %s167 = scalar_lea.vmem %s0, %s166
        %p168 = pneg %p35
        %p169 = pneg %p32
        %p170 = scmp.lt.s32.totalorder %s14, 5
        %s171 = scalar_select %p170, %s14, 5
        %s172 = smul.addr %s171, 24
        %s173 = smul.addr %s172, 8
        %s174 = scalar_lea.vmem %s1, %s173
        %p175 = pneg %p61
        %p176 = pneg %p58
        %p177 = scmp.lt.s32.totalorder %s14, 5
        %s178 = scalar_select %p177, %s14, 5
        %s179 = smul.addr %s178, 4
        %s180 = smul.addr %s179, 8
        %s181 = scalar_lea.vmem %s2, %s180
        %p182 = pneg %p87
        %p183 = pneg %p84
        %p184 = pneg %p113
        %p185 = pneg %p110
        %s186 = sand.u32 %s100, 1
        %s187 = sand.u32 %s100, 1
        %s188 = smul.addr %s187, 64
        %s189 = scalar_lea.vmem [#allocation2], %s188
        %p190 = scmp.lt.s32.totalorder %s14, 5
        %s191 = scalar_select %p190, %s14, 5
        %s192 = smul.addr %s191, 64
        %s193 = smul.addr %s192, 8
        %s194 = scalar_lea.vmem %s0, %s193
        %p195 = scmp.lt.s32.totalorder %s14, 5
        %s196 = scalar_select %p195, %s14, 5
        %s197 = smul.addr %s196, 24
        %s198 = smul.addr %s197, 8
        %s199 = scalar_lea.vmem %s1, %s198
        %p200 = scmp.lt.s32.totalorder %s14, 5
        %s201 = scalar_select %p200, %s14, 5
        %s202 = smul.addr %s201, 4
        %s203 = smul.addr %s202, 8
        %s204 = scalar_lea.vmem %s2, %s203
        %v205 = vld [vmem:[%s204] sm:$0xff]
        %v206 = vld [vmem:[%s204 + $0x8] sm:$0xff]
        %v207 = vld [vmem:[%s204 + $0x10] sm:$0xff]
        %v208 = vld [vmem:[%s204 + $0x18] sm:$0xff]
        %210 = vset.pattern.permute.xlu0 0
        %211 = vperm.xlu0 %210, %v205
        %v212 = vpop.permute.xlu0 %211
        %215 = vset.pattern.permute.xlu0 0
        %216 = vperm.xlu0 %215, %v206
        %v217 = vpop.permute.xlu0 %216
        %220 = vset.pattern.permute.xlu0 0
        %221 = vperm.xlu0 %220, %v207
        %v222 = vpop.permute.xlu0 %221
        %225 = vset.pattern.permute.xlu0 0
        %226 = vperm.xlu0 %225, %v208
        %v227 = vpop.permute.xlu0 %226
        %v229 = vld [vmem:[%s194] sm:$0xff]
        %v230 = vld [vmem:[%s194 + $0x8] sm:$0xff]
        %v231 = vld [vmem:[%s194 + $0x10] sm:$0xff]
        %v232 = vld [vmem:[%s194 + $0x18] sm:$0xff]
        %v233 = vld [vmem:[%s194 + $0x20] sm:$0xff]
        %v234 = vld [vmem:[%s194 + $0x28] sm:$0xff]
        %v235 = vld [vmem:[%s194 + $0x30] sm:$0xff]
        %v236 = vld [vmem:[%s194 + $0x38] sm:$0xff]
        %v237 = vld [vmem:[%s194 + $0x40] sm:$0xff]
        %v238 = vld [vmem:[%s194 + $0x48] sm:$0xff]
        %v239 = vld [vmem:[%s194 + $0x50] sm:$0xff]
        %v240 = vld [vmem:[%s194 + $0x58] sm:$0xff]
        %v241 = vld [vmem:[%s194 + $0x60] sm:$0xff]
        %v242 = vld [vmem:[%s194 + $0x68] sm:$0xff]
        %v243 = vld [vmem:[%s194 + $0x70] sm:$0xff]
        %v244 = vld [vmem:[%s194 + $0x78] sm:$0xff]
        %v245 = vld [vmem:[%s194 + $0x80] sm:$0xff]
        %v246 = vld [vmem:[%s194 + $0x88] sm:$0xff]
        %v247 = vld [vmem:[%s194 + $0x90] sm:$0xff]
        %v248 = vld [vmem:[%s194 + $0x98] sm:$0xff]
        %v249 = vld [vmem:[%s194 + $0xa0] sm:$0xff]
        %v250 = vld [vmem:[%s194 + $0xa8] sm:$0xff]
        %v251 = vld [vmem:[%s194 + $0xb0] sm:$0xff]
        %v252 = vld [vmem:[%s194 + $0xb8] sm:$0xff]
        %v253 = vld [vmem:[%s194 + $0xc0] sm:$0xff]
        %v254 = vld [vmem:[%s194 + $0xc8] sm:$0xff]
        %v255 = vld [vmem:[%s194 + $0xd0] sm:$0xff]
        %v256 = vld [vmem:[%s194 + $0xd8] sm:$0xff]
        %v257 = vld [vmem:[%s194 + $0xe0] sm:$0xff]
        %v258 = vld [vmem:[%s194 + $0xe8] sm:$0xff]
        %v259 = vld [vmem:[%s194 + $0xf0] sm:$0xff]
        %v260 = vld [vmem:[%s194 + $0xf8] sm:$0xff]
        %v261 = vld [vmem:[%s199] sm:$0xff]
        %v262 = vld [vmem:[%s199 + $0x8] sm:$0xff]
        %v263 = vld [vmem:[%s199 + $0x10] sm:$0xff]
        %v264 = vld [vmem:[%s199 + $0x18] sm:$0xff]
        %v265 = vld [vmem:[%s199 + $0x20] sm:$0xff]
        %v266 = vld [vmem:[%s199 + $0x28] sm:$0xff]
        %v267 = vld [vmem:[%s199 + $0x30] sm:$0xff]
        %v268 = vld [vmem:[%s199 + $0x38] sm:$0xff]
        %269 = vmatprep.subr.mxu0 0.0
        %270 = vmatpush1.msra.mxu0 %v229
        %271 = vmatprep.subr.mxu0 0.0
        %272 = vmatpush1.msra.mxu0 %v230
        %273 = vmatprep.subr.mxu0 0.0
        %274 = vmatpush1.msra.mxu0 %v231
        %275 = vmatprep.subr.mxu0 0.0
        %276 = vmatpush1.msra.mxu0 %v232
        %277 = vmatprep.subr.mxu0 0.0
        %278 = vmatpush1.msra.mxu0 %v233
        %279 = vmatprep.subr.mxu0 0.0
        %280 = vmatpush1.msra.mxu0 %v234
        %281 = vmatprep.subr.mxu0 0.0
        %282 = vmatpush1.msra.mxu0 %v235
        %283 = vmatprep.subr.mxu0 0.0
        %284 = vmatpush1.msra.mxu0 %v236
        %285 = vmatprep.subr.mxu0 0.0
        %286 = vmatpush1.msra.mxu0 %v237
        %287 = vmatprep.subr.mxu0 0.0
        %288 = vmatpush1.msra.mxu0 %v238
        %289 = vmatprep.subr.mxu0 0.0
        %290 = vmatpush1.msra.mxu0 %v239
        %291 = vmatprep.subr.mxu0 0.0
        %292 = vmatpush1.msra.mxu0 %v240
        %293 = vmatprep.subr.mxu0 0.0
        %294 = vmatpush1.msra.mxu0 %v241
        %295 = vmatprep.subr.mxu0 0.0
        %296 = vmatpush1.msra.mxu0 %v242
        %297 = vmatprep.subr.mxu0 0.0
        %298 = vmatpush1.msra.mxu0 %v243
        %299 = vmatprep.subr.mxu0 0.0
        %300 = vmatpush1.msra.mxu0 %v244
        %301 = vmatprep.subr.mxu0 0.0
        %302 = vmatpush1.msra.mxu0 %v245
        %303 = vmatprep.subr.mxu0 0.0
        %304 = vmatpush1.msra.mxu0 %v246
        %305 = vmatprep.subr.mxu0 0.0
        %306 = vmatpush1.msra.mxu0 %v247
        %307 = vmatprep.subr.mxu0 0.0
        %308 = vmatpush1.msra.mxu0 %v248
        %309 = vmatprep.subr.mxu0 0.0
        %310 = vmatpush1.msra.mxu0 %v249
        %311 = vmatprep.subr.mxu0 0.0
        %312 = vmatpush1.msra.mxu0 %v250
        %313 = vmatprep.subr.mxu0 0.0
        %314 = vmatpush1.msra.mxu0 %v251
        %315 = vmatprep.subr.mxu0 0.0
        %316 = vmatpush1.msra.mxu0 %v252
        %317 = vmatprep.subr.mxu0 0.0
        %318 = vmatpush1.msra.mxu0 %v253
        %319 = vmatprep.subr.mxu0 0.0
        %320 = vmatpush1.msra.mxu0 %v254
        %321 = vmatprep.subr.mxu0 0.0
        %322 = vmatpush1.msra.mxu0 %v255
        %323 = vmatprep.subr.mxu0 0.0
        %324 = vmatpush1.msra.mxu0 %v256
        %325 = vmatprep.subr.mxu0 0.0
        %326 = vmatpush1.msra.mxu0 %v257
        %327 = vmatprep.subr.mxu0 0.0
        %328 = vmatpush1.msra.mxu0 %v258
        %329 = vmatprep.subr.mxu0 0.0
        %330 = vmatpush1.msra.mxu0 %v259
        %331 = vmatprep.subr.mxu0 0.0
        %332 = vmatpush1.msra.mxu0 %v260
        %333 = vmatprep.mubr.f32.mxu0 %v262
        %334 = vmatmul.mubr.f32.gmra.mrb[0].mxu0 %v261
        %v335 = vpop.f32.mrb[0].mxu0
        %v336 = vadd.f32 0.0, %v335
        %v337 = vpop.f32.mrb[0].mxu0
        %338 = vmatprep.mubr.f32.mxu0 %v264
        %339 = vmatmul.mubr.f32.gmra.mrb[0].mxu0 %v263
        %v340 = vpop.f32.mrb[0].mxu0
        %v341 = vadd.f32 0.0, %v340
        %v342 = vpop.f32.mrb[0].mxu0
        %343 = vmatprep.mubr.f32.mxu0 %v266
        %344 = vmatmul.mubr.f32.gmra.mrb[0].mxu0 %v265
        %v345 = vpop.f32.mrb[0].mxu0
        %v346 = vadd.f32 0.0, %v345
        %v347 = vpop.f32.mrb[0].mxu0
        %348 = vmatprep.mubr.f32.mxu0 %v268
        %349 = vmatmul.mubr.f32.gmra.mrb[0].mxu0 %v267
        %v350 = vpop.f32.mrb[0].mxu0
        %v351 = vadd.f32 0.0, %v350
        %v352 = vpop.f32.mrb[0].mxu0
        %353 = vdwg.mxu0
        %v354 = vadd.f32 %v212, %v336
        %v355 = vadd.f32 %v217, %v341
        %v356 = vadd.f32 %v222, %v346
        %v357 = vadd.f32 %v227, %v351
        %s358 = scalar_lea.vmem %s199, 64
        %v359 = vld [vmem:[%s358] sm:$0xff]
        %v360 = vld [vmem:[%s358 + $0x8] sm:$0xff]
        %v361 = vld [vmem:[%s358 + $0x10] sm:$0xff]
        %v362 = vld [vmem:[%s358 + $0x18] sm:$0xff]
        %v363 = vld [vmem:[%s358 + $0x20] sm:$0xff]
        %v364 = vld [vmem:[%s358 + $0x28] sm:$0xff]
        %v365 = vld [vmem:[%s358 + $0x30] sm:$0xff]
        %v366 = vld [vmem:[%s358 + $0x38] sm:$0xff]
        %399 = vrot.lane.b32.xlu0 %v229, 127
        %v400 = vpop.permute.xlu0 %399
        %401 = vrot.lane.b32.xlu0 %v230, 127
        %v402 = vpop.permute.xlu0 %401
        %403 = vrot.lane.b32.xlu0 %v231, 127
        %v404 = vpop.permute.xlu0 %403
        %405 = vrot.lane.b32.xlu0 %v232, 127
        %v406 = vpop.permute.xlu0 %405
        %407 = vrot.lane.b32.xlu0 %v233, 127
        %v408 = vpop.permute.xlu0 %407
        %409 = vrot.lane.b32.xlu0 %v234, 127
        %v410 = vpop.permute.xlu0 %409
        %411 = vrot.lane.b32.xlu0 %v235, 127
        %v412 = vpop.permute.xlu0 %411
        %413 = vrot.lane.b32.xlu0 %v236, 127
        %v414 = vpop.permute.xlu0 %413
        %415 = vrot.lane.b32.xlu0 %v237, 127
        %v416 = vpop.permute.xlu0 %415
        %417 = vrot.lane.b32.xlu0 %v238, 127
        %v418 = vpop.permute.xlu0 %417
        %419 = vrot.lane.b32.xlu0 %v239, 127
        %v420 = vpop.permute.xlu0 %419
        %421 = vrot.lane.b32.xlu0 %v240, 127
        %v422 = vpop.permute.xlu0 %421
        %423 = vrot.lane.b32.xlu0 %v241, 127
        %v424 = vpop.permute.xlu0 %423
        %425 = vrot.lane.b32.xlu0 %v242, 127
        %v426 = vpop.permute.xlu0 %425
        %427 = vrot.lane.b32.xlu0 %v243, 127
        %v428 = vpop.permute.xlu0 %427
        %429 = vrot.lane.b32.xlu0 %v244, 127
        %v430 = vpop.permute.xlu0 %429
        %431 = vrot.lane.b32.xlu0 %v245, 127
        %v432 = vpop.permute.xlu0 %431
        %433 = vrot.lane.b32.xlu0 %v246, 127
        %v434 = vpop.permute.xlu0 %433
        %435 = vrot.lane.b32.xlu0 %v247, 127
        %v436 = vpop.permute.xlu0 %435
        %437 = vrot.lane.b32.xlu0 %v248, 127
        %v438 = vpop.permute.xlu0 %437
        %439 = vrot.lane.b32.xlu0 %v249, 127
        %v440 = vpop.permute.xlu0 %439
        %441 = vrot.lane.b32.xlu0 %v250, 127
        %v442 = vpop.permute.xlu0 %441
        %443 = vrot.lane.b32.xlu0 %v251, 127
        %v444 = vpop.permute.xlu0 %443
        %445 = vrot.lane.b32.xlu0 %v252, 127
        %v446 = vpop.permute.xlu0 %445
        %447 = vrot.lane.b32.xlu0 %v253, 127
        %v448 = vpop.permute.xlu0 %447
        %449 = vrot.lane.b32.xlu0 %v254, 127
        %v450 = vpop.permute.xlu0 %449
        %451 = vrot.lane.b32.xlu0 %v255, 127
        %v452 = vpop.permute.xlu0 %451
        %453 = vrot.lane.b32.xlu0 %v256, 127
        %v454 = vpop.permute.xlu0 %453
        %455 = vrot.lane.b32.xlu0 %v257, 127
        %v456 = vpop.permute.xlu0 %455
        %457 = vrot.lane.b32.xlu0 %v258, 127
        %v458 = vpop.permute.xlu0 %457
        %459 = vrot.lane.b32.xlu0 %v259, 127
        %v460 = vpop.permute.xlu0 %459
        %461 = vrot.lane.b32.xlu0 %v260, 127
        %v462 = vpop.permute.xlu0 %461
        %495 = vmatprep.subr.mxu0 0.0
        %496 = vmatpush1.msra.mxu0 %v400
        %497 = vmatprep.subr.mxu0 0.0
        %498 = vmatpush1.msra.mxu0 %v402
        %499 = vmatprep.subr.mxu0 0.0
        %500 = vmatpush1.msra.mxu0 %v404
        %501 = vmatprep.subr.mxu0 0.0
        %502 = vmatpush1.msra.mxu0 %v406
        %503 = vmatprep.subr.mxu0 0.0
        %504 = vmatpush1.msra.mxu0 %v408
        %505 = vmatprep.subr.mxu0 0.0
        %506 = vmatpush1.msra.mxu0 %v410
        %507 = vmatprep.subr.mxu0 0.0
        %508 = vmatpush1.msra.mxu0 %v412
        %509 = vmatprep.subr.mxu0 0.0
        %510 = vmatpush1.msra.mxu0 %v414
        %511 = vmatprep.subr.mxu0 0.0
        %512 = vmatpush1.msra.mxu0 %v416
        %513 = vmatprep.subr.mxu0 0.0
        %514 = vmatpush1.msra.mxu0 %v418
        %515 = vmatprep.subr.mxu0 0.0
        %516 = vmatpush1.msra.mxu0 %v420
        %517 = vmatprep.subr.mxu0 0.0
        %518 = vmatpush1.msra.mxu0 %v422
        %519 = vmatprep.subr.mxu0 0.0
        %520 = vmatpush1.msra.mxu0 %v424
        %521 = vmatprep.subr.mxu0 0.0
        %522 = vmatpush1.msra.mxu0 %v426
        %523 = vmatprep.subr.mxu0 0.0
        %524 = vmatpush1.msra.mxu0 %v428
        %525 = vmatprep.subr.mxu0 0.0
        %526 = vmatpush1.msra.mxu0 %v430
        %527 = vmatprep.subr.mxu0 0.0
        %528 = vmatpush1.msra.mxu0 %v432
        %529 = vmatprep.subr.mxu0 0.0
        %530 = vmatpush1.msra.mxu0 %v434
        %531 = vmatprep.subr.mxu0 0.0
        %532 = vmatpush1.msra.mxu0 %v436
        %533 = vmatprep.subr.mxu0 0.0
        %534 = vmatpush1.msra.mxu0 %v438
        %535 = vmatprep.subr.mxu0 0.0
        %536 = vmatpush1.msra.mxu0 %v440
        %537 = vmatprep.subr.mxu0 0.0
        %538 = vmatpush1.msra.mxu0 %v442
        %539 = vmatprep.subr.mxu0 0.0
        %540 = vmatpush1.msra.mxu0 %v444
        %541 = vmatprep.subr.mxu0 0.0
        %542 = vmatpush1.msra.mxu0 %v446
        %543 = vmatprep.subr.mxu0 0.0
        %544 = vmatpush1.msra.mxu0 %v448
        %545 = vmatprep.subr.mxu0 0.0
        %546 = vmatpush1.msra.mxu0 %v450
        %547 = vmatprep.subr.mxu0 0.0
        %548 = vmatpush1.msra.mxu0 %v452
        %549 = vmatprep.subr.mxu0 0.0
        %550 = vmatpush1.msra.mxu0 %v454
        %551 = vmatprep.subr.mxu0 0.0
        %552 = vmatpush1.msra.mxu0 %v456
        %553 = vmatprep.subr.mxu0 0.0
        %554 = vmatpush1.msra.mxu0 %v458
        %555 = vmatprep.subr.mxu0 0.0
        %556 = vmatpush1.msra.mxu0 %v460
        %557 = vmatprep.subr.mxu0 0.0
        %558 = vmatpush1.msra.mxu0 %v462
        %559 = vmatprep.mubr.f32.mxu0 %v360
        %560 = vmatmul.mubr.f32.gmra.mrb[0].mxu0 %v359
        %v561 = vpop.f32.mrb[0].mxu0
        %v562 = vadd.f32 0.0, %v561
        %v563 = vpop.f32.mrb[0].mxu0
        %564 = vmatprep.mubr.f32.mxu0 %v362
        %565 = vmatmul.mubr.f32.gmra.mrb[0].mxu0 %v361
        %v566 = vpop.f32.mrb[0].mxu0
        %v567 = vadd.f32 0.0, %v566
        %v568 = vpop.f32.mrb[0].mxu0
        %569 = vmatprep.mubr.f32.mxu0 %v364
        %570 = vmatmul.mubr.f32.gmra.mrb[0].mxu0 %v363
        %v571 = vpop.f32.mrb[0].mxu0
        %v572 = vadd.f32 0.0, %v571
        %v573 = vpop.f32.mrb[0].mxu0
        %574 = vmatprep.mubr.f32.mxu0 %v366
        %575 = vmatmul.mubr.f32.gmra.mrb[0].mxu0 %v365
        %v576 = vpop.f32.mrb[0].mxu0
        %v577 = vadd.f32 0.0, %v576
        %v578 = vpop.f32.mrb[0].mxu0
        %579 = vdwg.mxu0
        %v580 = vadd.f32 %v354, %v562
        %v581 = vadd.f32 %v355, %v567
        %v582 = vadd.f32 %v356, %v572
        %v583 = vadd.f32 %v357, %v577
        %s584 = scalar_lea.vmem %s199, 128
        %v585 = vld [vmem:[%s584] sm:$0xff]
        %v586 = vld [vmem:[%s584 + $0x8] sm:$0xff]
        %v587 = vld [vmem:[%s584 + $0x10] sm:$0xff]
        %v588 = vld [vmem:[%s584 + $0x18] sm:$0xff]
        %v589 = vld [vmem:[%s584 + $0x20] sm:$0xff]
        %v590 = vld [vmem:[%s584 + $0x28] sm:$0xff]
        %v591 = vld [vmem:[%s584 + $0x30] sm:$0xff]
        %v592 = vld [vmem:[%s584 + $0x38] sm:$0xff]
        %593 = vrot.lane.b32.xlu0 %v229, 126
        %v594 = vpop.permute.xlu0 %593
        %595 = vrot.lane.b32.xlu0 %v230, 126
        %v596 = vpop.permute.xlu0 %595
        %597 = vrot.lane.b32.xlu0 %v231, 126
        %v598 = vpop.permute.xlu0 %597
        %599 = vrot.lane.b32.xlu0 %v232, 126
        %v600 = vpop.permute.xlu0 %599
        %601 = vrot.lane.b32.xlu0 %v233, 126
        %v602 = vpop.permute.xlu0 %601
        %603 = vrot.lane.b32.xlu0 %v234, 126
        %v604 = vpop.permute.xlu0 %603
        %605 = vrot.lane.b32.xlu0 %v235, 126
        %v606 = vpop.permute.xlu0 %605
        %607 = vrot.lane.b32.xlu0 %v236, 126
        %v608 = vpop.permute.xlu0 %607
        %609 = vrot.lane.b32.xlu0 %v237, 126
        %v610 = vpop.permute.xlu0 %609
        %611 = vrot.lane.b32.xlu0 %v238, 126
        %v612 = vpop.permute.xlu0 %611
        %613 = vrot.lane.b32.xlu0 %v239, 126
        %v614 = vpop.permute.xlu0 %613
        %615 = vrot.lane.b32.xlu0 %v240, 126
        %v616 = vpop.permute.xlu0 %615
        %617 = vrot.lane.b32.xlu0 %v241, 126
        %v618 = vpop.permute.xlu0 %617
        %619 = vrot.lane.b32.xlu0 %v242, 126
        %v620 = vpop.permute.xlu0 %619
        %621 = vrot.lane.b32.xlu0 %v243, 126
        %v622 = vpop.permute.xlu0 %621
        %623 = vrot.lane.b32.xlu0 %v244, 126
        %v624 = vpop.permute.xlu0 %623
        %625 = vrot.lane.b32.xlu0 %v245, 126
        %v626 = vpop.permute.xlu0 %625
        %627 = vrot.lane.b32.xlu0 %v246, 126
        %v628 = vpop.permute.xlu0 %627
        %629 = vrot.lane.b32.xlu0 %v247, 126
        %v630 = vpop.permute.xlu0 %629
        %631 = vrot.lane.b32.xlu0 %v248, 126
        %v632 = vpop.permute.xlu0 %631
        %633 = vrot.lane.b32.xlu0 %v249, 126
        %v634 = vpop.permute.xlu0 %633
        %635 = vrot.lane.b32.xlu0 %v250, 126
        %v636 = vpop.permute.xlu0 %635
        %637 = vrot.lane.b32.xlu0 %v251, 126
        %v638 = vpop.permute.xlu0 %637
        %639 = vrot.lane.b32.xlu0 %v252, 126
        %v640 = vpop.permute.xlu0 %639
        %641 = vrot.lane.b32.xlu0 %v253, 126
        %v642 = vpop.permute.xlu0 %641
        %643 = vrot.lane.b32.xlu0 %v254, 126
        %v644 = vpop.permute.xlu0 %643
        %645 = vrot.lane.b32.xlu0 %v255, 126
        %v646 = vpop.permute.xlu0 %645
        %647 = vrot.lane.b32.xlu0 %v256, 126
        %v648 = vpop.permute.xlu0 %647
        %649 = vrot.lane.b32.xlu0 %v257, 126
        %v650 = vpop.permute.xlu0 %649
        %651 = vrot.lane.b32.xlu0 %v258, 126
        %v652 = vpop.permute.xlu0 %651
        %653 = vrot.lane.b32.xlu0 %v259, 126
        %v654 = vpop.permute.xlu0 %653
        %655 = vrot.lane.b32.xlu0 %v260, 126
        %v656 = vpop.permute.xlu0 %655
        %689 = vmatprep.subr.mxu0 0.0
        %690 = vmatpush1.msra.mxu0 %v594
        %691 = vmatprep.subr.mxu0 0.0
        %692 = vmatpush1.msra.mxu0 %v596
        %693 = vmatprep.subr.mxu0 0.0
        %694 = vmatpush1.msra.mxu0 %v598
        %695 = vmatprep.subr.mxu0 0.0
        %696 = vmatpush1.msra.mxu0 %v600
        %697 = vmatprep.subr.mxu0 0.0
        %698 = vmatpush1.msra.mxu0 %v602
        %699 = vmatprep.subr.mxu0 0.0
        %700 = vmatpush1.msra.mxu0 %v604
        %701 = vmatprep.subr.mxu0 0.0
        %702 = vmatpush1.msra.mxu0 %v606
        %703 = vmatprep.subr.mxu0 0.0
        %704 = vmatpush1.msra.mxu0 %v608
        %705 = vmatprep.subr.mxu0 0.0
        %706 = vmatpush1.msra.mxu0 %v610
        %707 = vmatprep.subr.mxu0 0.0
        %708 = vmatpush1.msra.mxu0 %v612
        %709 = vmatprep.subr.mxu0 0.0
        %710 = vmatpush1.msra.mxu0 %v614
        %711 = vmatprep.subr.mxu0 0.0
        %712 = vmatpush1.msra.mxu0 %v616
        %713 = vmatprep.subr.mxu0 0.0
        %714 = vmatpush1.msra.mxu0 %v618
        %715 = vmatprep.subr.mxu0 0.0
        %716 = vmatpush1.msra.mxu0 %v620
        %717 = vmatprep.subr.mxu0 0.0
        %718 = vmatpush1.msra.mxu0 %v622
        %719 = vmatprep.subr.mxu0 0.0
        %720 = vmatpush1.msra.mxu0 %v624
        %721 = vmatprep.subr.mxu0 0.0
        %722 = vmatpush1.msra.mxu0 %v626
        %723 = vmatprep.subr.mxu0 0.0
        %724 = vmatpush1.msra.mxu0 %v628
        %725 = vmatprep.subr.mxu0 0.0
        %726 = vmatpush1.msra.mxu0 %v630
        %727 = vmatprep.subr.mxu0 0.0
        %728 = vmatpush1.msra.mxu0 %v632
        %729 = vmatprep.subr.mxu0 0.0
        %730 = vmatpush1.msra.mxu0 %v634
        %731 = vmatprep.subr.mxu0 0.0
        %732 = vmatpush1.msra.mxu0 %v636
        %733 = vmatprep.subr.mxu0 0.0
        %734 = vmatpush1.msra.mxu0 %v638
        %735 = vmatprep.subr.mxu0 0.0
        %736 = vmatpush1.msra.mxu0 %v640
        %737 = vmatprep.subr.mxu0 0.0
        %738 = vmatpush1.msra.mxu0 %v642
        %739 = vmatprep.subr.mxu0 0.0
        %740 = vmatpush1.msra.mxu0 %v644
        %741 = vmatprep.subr.mxu0 0.0
        %742 = vmatpush1.msra.mxu0 %v646
        %743 = vmatprep.subr.mxu0 0.0
        %744 = vmatpush1.msra.mxu0 %v648
        %745 = vmatprep.subr.mxu0 0.0
        %746 = vmatpush1.msra.mxu0 %v650
        %747 = vmatprep.subr.mxu0 0.0
        %748 = vmatpush1.msra.mxu0 %v652
        %749 = vmatprep.subr.mxu0 0.0
        %750 = vmatpush1.msra.mxu0 %v654
        %751 = vmatprep.subr.mxu0 0.0
        %752 = vmatpush1.msra.mxu0 %v656
        %753 = vmatprep.mubr.f32.mxu0 %v586
        %754 = vmatmul.mubr.f32.gmra.mrb[0].mxu0 %v585
        %v755 = vpop.f32.mrb[0].mxu0
        %v756 = vadd.f32 0.0, %v755
        %v757 = vpop.f32.mrb[0].mxu0
        %758 = vmatprep.mubr.f32.mxu0 %v588
        %759 = vmatmul.mubr.f32.gmra.mrb[0].mxu0 %v587
        %v760 = vpop.f32.mrb[0].mxu0
        %v761 = vadd.f32 0.0, %v760
        %v762 = vpop.f32.mrb[0].mxu0
        %763 = vmatprep.mubr.f32.mxu0 %v590
        %764 = vmatmul.mubr.f32.gmra.mrb[0].mxu0 %v589
        %v765 = vpop.f32.mrb[0].mxu0
        %v766 = vadd.f32 0.0, %v765
        %v767 = vpop.f32.mrb[0].mxu0
        %768 = vmatprep.mubr.f32.mxu0 %v592
        %769 = vmatmul.mubr.f32.gmra.mrb[0].mxu0 %v591
        %v770 = vpop.f32.mrb[0].mxu0
        %v771 = vadd.f32 0.0, %v770
        %v772 = vpop.f32.mrb[0].mxu0
        %773 = vdwg.mxu0
        %v774 = vadd.f32 %v580, %v756
        %v775 = vadd.f32 %v581, %v761
        %v776 = vadd.f32 %v582, %v766
        %v777 = vadd.f32 %v583, %v771
        %vm778 = vcmask 130048
        %779 = vst.msk [vmem:[%s189] sm:$0xff] %vm778, %v774
        %780 = vst.msk [vmem:[%s189 + $0x8] sm:$0xff] %vm778, %v775
        %781 = vst.msk [vmem:[%s189 + $0x10] sm:$0xff] %vm778, %v776
        %782 = vst.msk [vmem:[%s189 + $0x18] sm:$0xff] %vm778, %v777
        %s783 = scalar_lea.vmem %s194, 256
        %v784 = vld [vmem:[%s783] sm:$0xff]
        %v785 = vld [vmem:[%s783 + $0x8] sm:$0xff]
        %v786 = vld [vmem:[%s783 + $0x10] sm:$0xff]
        %v787 = vld [vmem:[%s783 + $0x18] sm:$0xff]
        %v788 = vld [vmem:[%s783 + $0x20] sm:$0xff]
        %v789 = vld [vmem:[%s783 + $0x28] sm:$0xff]
        %v790 = vld [vmem:[%s783 + $0x30] sm:$0xff]
        %v791 = vld [vmem:[%s783 + $0x38] sm:$0xff]
        %v792 = vld [vmem:[%s783 + $0x40] sm:$0xff]
        %v793 = vld [vmem:[%s783 + $0x48] sm:$0xff]
        %v794 = vld [vmem:[%s783 + $0x50] sm:$0xff]
        %v795 = vld [vmem:[%s783 + $0x58] sm:$0xff]
        %v796 = vld [vmem:[%s783 + $0x60] sm:$0xff]
        %v797 = vld [vmem:[%s783 + $0x68] sm:$0xff]
        %v798 = vld [vmem:[%s783 + $0x70] sm:$0xff]
        %v799 = vld [vmem:[%s783 + $0x78] sm:$0xff]
        %v800 = vld [vmem:[%s783 + $0x80] sm:$0xff]
        %v801 = vld [vmem:[%s783 + $0x88] sm:$0xff]
        %v802 = vld [vmem:[%s783 + $0x90] sm:$0xff]
        %v803 = vld [vmem:[%s783 + $0x98] sm:$0xff]
        %v804 = vld [vmem:[%s783 + $0xa0] sm:$0xff]
        %v805 = vld [vmem:[%s783 + $0xa8] sm:$0xff]
        %v806 = vld [vmem:[%s783 + $0xb0] sm:$0xff]
        %v807 = vld [vmem:[%s783 + $0xb8] sm:$0xff]
        %v808 = vld [vmem:[%s783 + $0xc0] sm:$0xff]
        %v809 = vld [vmem:[%s783 + $0xc8] sm:$0xff]
        %v810 = vld [vmem:[%s783 + $0xd0] sm:$0xff]
        %v811 = vld [vmem:[%s783 + $0xd8] sm:$0xff]
        %v812 = vld [vmem:[%s783 + $0xe0] sm:$0xff]
        %v813 = vld [vmem:[%s783 + $0xe8] sm:$0xff]
        %v814 = vld [vmem:[%s783 + $0xf0] sm:$0xff]
        %v815 = vld [vmem:[%s783 + $0xf8] sm:$0xff]
        %v816 = vld [vmem:[%s199] sm:$0xff]
        %v817 = vld [vmem:[%s199 + $0x8] sm:$0xff]
        %v818 = vld [vmem:[%s199 + $0x10] sm:$0xff]
        %v819 = vld [vmem:[%s199 + $0x18] sm:$0xff]
        %v820 = vld [vmem:[%s199 + $0x20] sm:$0xff]
        %v821 = vld [vmem:[%s199 + $0x28] sm:$0xff]
        %v822 = vld [vmem:[%s199 + $0x30] sm:$0xff]
        %v823 = vld [vmem:[%s199 + $0x38] sm:$0xff]
        %824 = vmatprep.subr.mxu0 0.0
        %825 = vmatpush1.msra.mxu0 %v784
        %826 = vmatprep.subr.mxu0 0.0
        %827 = vmatpush1.msra.mxu0 %v785
        %828 = vmatprep.subr.mxu0 0.0
        %829 = vmatpush1.msra.mxu0 %v786
        %830 = vmatprep.subr.mxu0 0.0
        %831 = vmatpush1.msra.mxu0 %v787
        %832 = vmatprep.subr.mxu0 0.0
        %833 = vmatpush1.msra.mxu0 %v788
        %834 = vmatprep.subr.mxu0 0.0
        %835 = vmatpush1.msra.mxu0 %v789
        %836 = vmatprep.subr.mxu0 0.0
        %837 = vmatpush1.msra.mxu0 %v790
        %838 = vmatprep.subr.mxu0 0.0
        %839 = vmatpush1.msra.mxu0 %v791
        %840 = vmatprep.subr.mxu0 0.0
        %841 = vmatpush1.msra.mxu0 %v792
        %842 = vmatprep.subr.mxu0 0.0
        %843 = vmatpush1.msra.mxu0 %v793
        %844 = vmatprep.subr.mxu0 0.0
        %845 = vmatpush1.msra.mxu0 %v794
        %846 = vmatprep.subr.mxu0 0.0
        %847 = vmatpush1.msra.mxu0 %v795
        %848 = vmatprep.subr.mxu0 0.0
        %849 = vmatpush1.msra.mxu0 %v796
        %850 = vmatprep.subr.mxu0 0.0
        %851 = vmatpush1.msra.mxu0 %v797
        %852 = vmatprep.subr.mxu0 0.0
        %853 = vmatpush1.msra.mxu0 %v798
        %854 = vmatprep.subr.mxu0 0.0
        %855 = vmatpush1.msra.mxu0 %v799
        %856 = vmatprep.subr.mxu0 0.0
        %857 = vmatpush1.msra.mxu0 %v800
        %858 = vmatprep.subr.mxu0 0.0
        %859 = vmatpush1.msra.mxu0 %v801
        %860 = vmatprep.subr.mxu0 0.0
        %861 = vmatpush1.msra.mxu0 %v802
        %862 = vmatprep.subr.mxu0 0.0
        %863 = vmatpush1.msra.mxu0 %v803
        %864 = vmatprep.subr.mxu0 0.0
        %865 = vmatpush1.msra.mxu0 %v804
        %866 = vmatprep.subr.mxu0 0.0
        %867 = vmatpush1.msra.mxu0 %v805
        %868 = vmatprep.subr.mxu0 0.0
        %869 = vmatpush1.msra.mxu0 %v806
        %870 = vmatprep.subr.mxu0 0.0
        %871 = vmatpush1.msra.mxu0 %v807
        %872 = vmatprep.subr.mxu0 0.0
        %873 = vmatpush1.msra.mxu0 %v808
        %874 = vmatprep.subr.mxu0 0.0
        %875 = vmatpush1.msra.mxu0 %v809
        %876 = vmatprep.subr.mxu0 0.0
        %877 = vmatpush1.msra.mxu0 %v810
        %878 = vmatprep.subr.mxu0 0.0
        %879 = vmatpush1.msra.mxu0 %v811
        %880 = vmatprep.subr.mxu0 0.0
        %881 = vmatpush1.msra.mxu0 %v812
        %882 = vmatprep.subr.mxu0 0.0
        %883 = vmatpush1.msra.mxu0 %v813
        %884 = vmatprep.subr.mxu0 0.0
        %885 = vmatpush1.msra.mxu0 %v814
        %886 = vmatprep.subr.mxu0 0.0
        %887 = vmatpush1.msra.mxu0 %v815
        %888 = vmatprep.mubr.f32.mxu0 %v817
        %889 = vmatmul.mubr.f32.gmra.mrb[0].mxu0 %v816
        %v890 = vpop.f32.mrb[0].mxu0
        %v891 = vadd.f32 0.0, %v890
        %v892 = vpop.f32.mrb[0].mxu0
        %893 = vmatprep.mubr.f32.mxu0 %v819
        %894 = vmatmul.mubr.f32.gmra.mrb[0].mxu0 %v818
        %v895 = vpop.f32.mrb[0].mxu0
        %v896 = vadd.f32 0.0, %v895
        %v897 = vpop.f32.mrb[0].mxu0
        %898 = vmatprep.mubr.f32.mxu0 %v821
        %899 = vmatmul.mubr.f32.gmra.mrb[0].mxu0 %v820
        %v900 = vpop.f32.mrb[0].mxu0
        %v901 = vadd.f32 0.0, %v900
        %v902 = vpop.f32.mrb[0].mxu0
        %903 = vmatprep.mubr.f32.mxu0 %v823
        %904 = vmatmul.mubr.f32.gmra.mrb[0].mxu0 %v822
        %v905 = vpop.f32.mrb[0].mxu0
        %v906 = vadd.f32 0.0, %v905
        %v907 = vpop.f32.mrb[0].mxu0
        %908 = vdwg.mxu0
        %v909 = vadd.f32 %v212, %v891
        %v910 = vadd.f32 %v217, %v896
        %v911 = vadd.f32 %v222, %v901
        %v912 = vadd.f32 %v227, %v906
        %v913 = vld [vmem:[%s358] sm:$0xff]
        %v914 = vld [vmem:[%s358 + $0x8] sm:$0xff]
        %v915 = vld [vmem:[%s358 + $0x10] sm:$0xff]
        %v916 = vld [vmem:[%s358 + $0x18] sm:$0xff]
        %v917 = vld [vmem:[%s358 + $0x20] sm:$0xff]
        %v918 = vld [vmem:[%s358 + $0x28] sm:$0xff]
        %v919 = vld [vmem:[%s358 + $0x30] sm:$0xff]
        %v920 = vld [vmem:[%s358 + $0x38] sm:$0xff]
        %953 = vrot.lane.b32.xlu0 %v784, 127
        %v954 = vpop.permute.xlu0 %953
        %955 = vrot.lane.b32.xlu0 %v785, 127
        %v956 = vpop.permute.xlu0 %955
        %957 = vrot.lane.b32.xlu0 %v786, 127
        %v958 = vpop.permute.xlu0 %957
        %959 = vrot.lane.b32.xlu0 %v787, 127
        %v960 = vpop.permute.xlu0 %959
        %961 = vrot.lane.b32.xlu0 %v788, 127
        %v962 = vpop.permute.xlu0 %961
        %963 = vrot.lane.b32.xlu0 %v789, 127
        %v964 = vpop.permute.xlu0 %963
        %965 = vrot.lane.b32.xlu0 %v790, 127
        %v966 = vpop.permute.xlu0 %965
        %967 = vrot.lane.b32.xlu0 %v791, 127
        %v968 = vpop.permute.xlu0 %967
        %969 = vrot.lane.b32.xlu0 %v792, 127
        %v970 = vpop.permute.xlu0 %969
        %971 = vrot.lane.b32.xlu0 %v793, 127
        %v972 = vpop.permute.xlu0 %971
        %973 = vrot.lane.b32.xlu0 %v794, 127
        %v974 = vpop.permute.xlu0 %973
        %975 = vrot.lane.b32.xlu0 %v795, 127
        %v976 = vpop.permute.xlu0 %975
        %977 = vrot.lane.b32.xlu0 %v796, 127
        %v978 = vpop.permute.xlu0 %977
        %979 = vrot.lane.b32.xlu0 %v797, 127
        %v980 = vpop.permute.xlu0 %979
        %981 = vrot.lane.b32.xlu0 %v798, 127
        %v982 = vpop.permute.xlu0 %981
        %983 = vrot.lane.b32.xlu0 %v799, 127
        %v984 = vpop.permute.xlu0 %983
        %985 = vrot.lane.b32.xlu0 %v800, 127
        %v986 = vpop.permute.xlu0 %985
        %987 = vrot.lane.b32.xlu0 %v801, 127
        %v988 = vpop.permute.xlu0 %987
        %989 = vrot.lane.b32.xlu0 %v802, 127
        %v990 = vpop.permute.xlu0 %989
        %991 = vrot.lane.b32.xlu0 %v803, 127
        %v992 = vpop.permute.xlu0 %991
        %993 = vrot.lane.b32.xlu0 %v804, 127
        %v994 = vpop.permute.xlu0 %993
        %995 = vrot.lane.b32.xlu0 %v805, 127
        %v996 = vpop.permute.xlu0 %995
        %997 = vrot.lane.b32.xlu0 %v806, 127
        %v998 = vpop.permute.xlu0 %997
        %999 = vrot.lane.b32.xlu0 %v807, 127
        %v1000 = vpop.permute.xlu0 %999
        %1001 = vrot.lane.b32.xlu0 %v808, 127
        %v1002 = vpop.permute.xlu0 %1001
        %1003 = vrot.lane.b32.xlu0 %v809, 127
        %v1004 = vpop.permute.xlu0 %1003
        %1005 = vrot.lane.b32.xlu0 %v810, 127
        %v1006 = vpop.permute.xlu0 %1005
        %1007 = vrot.lane.b32.xlu0 %v811, 127
        %v1008 = vpop.permute.xlu0 %1007
        %1009 = vrot.lane.b32.xlu0 %v812, 127
        %v1010 = vpop.permute.xlu0 %1009
        %1011 = vrot.lane.b32.xlu0 %v813, 127
        %v1012 = vpop.permute.xlu0 %1011
        %1013 = vrot.lane.b32.xlu0 %v814, 127
        %v1014 = vpop.permute.xlu0 %1013
        %1015 = vrot.lane.b32.xlu0 %v815, 127
        %v1016 = vpop.permute.xlu0 %1015
        %1049 = vmatprep.subr.mxu0 0.0
        %1050 = vmatpush1.msra.mxu0 %v954
        %1051 = vmatprep.subr.mxu0 0.0
        %1052 = vmatpush1.msra.mxu0 %v956
        %1053 = vmatprep.subr.mxu0 0.0
        %1054 = vmatpush1.msra.mxu0 %v958
        %1055 = vmatprep.subr.mxu0 0.0
        %1056 = vmatpush1.msra.mxu0 %v960
        %1057 = vmatprep.subr.mxu0 0.0
        %1058 = vmatpush1.msra.mxu0 %v962
        %1059 = vmatprep.subr.mxu0 0.0
        %1060 = vmatpush1.msra.mxu0 %v964
        %1061 = vmatprep.subr.mxu0 0.0
        %1062 = vmatpush1.msra.mxu0 %v966
        %1063 = vmatprep.subr.mxu0 0.0
        %1064 = vmatpush1.msra.mxu0 %v968
        %1065 = vmatprep.subr.mxu0 0.0
        %1066 = vmatpush1.msra.mxu0 %v970
        %1067 = vmatprep.subr.mxu0 0.0
        %1068 = vmatpush1.msra.mxu0 %v972
        %1069 = vmatprep.subr.mxu0 0.0
        %1070 = vmatpush1.msra.mxu0 %v974
        %1071 = vmatprep.subr.mxu0 0.0
        %1072 = vmatpush1.msra.mxu0 %v976
        %1073 = vmatprep.subr.mxu0 0.0
        %1074 = vmatpush1.msra.mxu0 %v978
        %1075 = vmatprep.subr.mxu0 0.0
        %1076 = vmatpush1.msra.mxu0 %v980
        %1077 = vmatprep.subr.mxu0 0.0
        %1078 = vmatpush1.msra.mxu0 %v982
        %1079 = vmatprep.subr.mxu0 0.0
        %1080 = vmatpush1.msra.mxu0 %v984
        %1081 = vmatprep.subr.mxu0 0.0
        %1082 = vmatpush1.msra.mxu0 %v986
        %1083 = vmatprep.subr.mxu0 0.0
        %1084 = vmatpush1.msra.mxu0 %v988
        %1085 = vmatprep.subr.mxu0 0.0
        %1086 = vmatpush1.msra.mxu0 %v990
        %1087 = vmatprep.subr.mxu0 0.0
        %1088 = vmatpush1.msra.mxu0 %v992
        %1089 = vmatprep.subr.mxu0 0.0
        %1090 = vmatpush1.msra.mxu0 %v994
        %1091 = vmatprep.subr.mxu0 0.0
        %1092 = vmatpush1.msra.mxu0 %v996
        %1093 = vmatprep.subr.mxu0 0.0
        %1094 = vmatpush1.msra.mxu0 %v998
        %1095 = vmatprep.subr.mxu0 0.0
        %1096 = vmatpush1.msra.mxu0 %v1000
        %1097 = vmatprep.subr.mxu0 0.0
        %1098 = vmatpush1.msra.mxu0 %v1002
        %1099 = vmatprep.subr.mxu0 0.0
        %1100 = vmatpush1.msra.mxu0 %v1004
        %1101 = vmatprep.subr.mxu0 0.0
        %1102 = vmatpush1.msra.mxu0 %v1006
        %1103 = vmatprep.subr.mxu0 0.0
        %1104 = vmatpush1.msra.mxu0 %v1008
        %1105 = vmatprep.subr.mxu0 0.0
        %1106 = vmatpush1.msra.mxu0 %v1010
        %1107 = vmatprep.subr.mxu0 0.0
        %1108 = vmatpush1.msra.mxu0 %v1012
        %1109 = vmatprep.subr.mxu0 0.0
        %1110 = vmatpush1.msra.mxu0 %v1014
        %1111 = vmatprep.subr.mxu0 0.0
        %1112 = vmatpush1.msra.mxu0 %v1016
        %1113 = vmatprep.mubr.f32.mxu0 %v914
        %1114 = vmatmul.mubr.f32.gmra.mrb[0].mxu0 %v913
        %v1115 = vpop.f32.mrb[0].mxu0
        %v1116 = vadd.f32 0.0, %v1115
        %v1117 = vpop.f32.mrb[0].mxu0
        %1118 = vmatprep.mubr.f32.mxu0 %v916
        %1119 = vmatmul.mubr.f32.gmra.mrb[0].mxu0 %v915
        %v1120 = vpop.f32.mrb[0].mxu0
        %v1121 = vadd.f32 0.0, %v1120
        %v1122 = vpop.f32.mrb[0].mxu0
        %1123 = vmatprep.mubr.f32.mxu0 %v918
        %1124 = vmatmul.mubr.f32.gmra.mrb[0].mxu0 %v917
        %v1125 = vpop.f32.mrb[0].mxu0
        %v1126 = vadd.f32 0.0, %v1125
        %v1127 = vpop.f32.mrb[0].mxu0
        %1128 = vmatprep.mubr.f32.mxu0 %v920
        %1129 = vmatmul.mubr.f32.gmra.mrb[0].mxu0 %v919
        %v1130 = vpop.f32.mrb[0].mxu0
        %v1131 = vadd.f32 0.0, %v1130
        %v1132 = vpop.f32.mrb[0].mxu0
        %1133 = vdwg.mxu0
        %v1134 = vadd.f32 %v909, %v1116
        %v1135 = vadd.f32 %v910, %v1121
        %v1136 = vadd.f32 %v911, %v1126
        %v1137 = vadd.f32 %v912, %v1131
        %v1138 = vld [vmem:[%s584] sm:$0xff]
        %v1139 = vld [vmem:[%s584 + $0x8] sm:$0xff]
        %v1140 = vld [vmem:[%s584 + $0x10] sm:$0xff]
        %v1141 = vld [vmem:[%s584 + $0x18] sm:$0xff]
        %v1142 = vld [vmem:[%s584 + $0x20] sm:$0xff]
        %v1143 = vld [vmem:[%s584 + $0x28] sm:$0xff]
        %v1144 = vld [vmem:[%s584 + $0x30] sm:$0xff]
        %v1145 = vld [vmem:[%s584 + $0x38] sm:$0xff]
        %1146 = vrot.lane.b32.xlu0 %v784, 126
        %v1147 = vpop.permute.xlu0 %1146
        %1148 = vrot.lane.b32.xlu0 %v785, 126
        %v1149 = vpop.permute.xlu0 %1148
        %1150 = vrot.lane.b32.xlu0 %v786, 126
        %v1151 = vpop.permute.xlu0 %1150
        %1152 = vrot.lane.b32.xlu0 %v787, 126
        %v1153 = vpop.permute.xlu0 %1152
        %1154 = vrot.lane.b32.xlu0 %v788, 126
        %v1155 = vpop.permute.xlu0 %1154
        %1156 = vrot.lane.b32.xlu0 %v789, 126
        %v1157 = vpop.permute.xlu0 %1156
        %1158 = vrot.lane.b32.xlu0 %v790, 126
        %v1159 = vpop.permute.xlu0 %1158
        %1160 = vrot.lane.b32.xlu0 %v791, 126
        %v1161 = vpop.permute.xlu0 %1160
        %1162 = vrot.lane.b32.xlu0 %v792, 126
        %v1163 = vpop.permute.xlu0 %1162
        %1164 = vrot.lane.b32.xlu0 %v793, 126
        %v1165 = vpop.permute.xlu0 %1164
        %1166 = vrot.lane.b32.xlu0 %v794, 126
        %v1167 = vpop.permute.xlu0 %1166
        %1168 = vrot.lane.b32.xlu0 %v795, 126
        %v1169 = vpop.permute.xlu0 %1168
        %1170 = vrot.lane.b32.xlu0 %v796, 126
        %v1171 = vpop.permute.xlu0 %1170
        %1172 = vrot.lane.b32.xlu0 %v797, 126
        %v1173 = vpop.permute.xlu0 %1172
        %1174 = vrot.lane.b32.xlu0 %v798, 126
        %v1175 = vpop.permute.xlu0 %1174
        %1176 = vrot.lane.b32.xlu0 %v799, 126
        %v1177 = vpop.permute.xlu0 %1176
        %1178 = vrot.lane.b32.xlu0 %v800, 126
        %v1179 = vpop.permute.xlu0 %1178
        %1180 = vrot.lane.b32.xlu0 %v801, 126
        %v1181 = vpop.permute.xlu0 %1180
        %1182 = vrot.lane.b32.xlu0 %v802, 126
        %v1183 = vpop.permute.xlu0 %1182
        %1184 = vrot.lane.b32.xlu0 %v803, 126
        %v1185 = vpop.permute.xlu0 %1184
        %1186 = vrot.lane.b32.xlu0 %v804, 126
        %v1187 = vpop.permute.xlu0 %1186
        %1188 = vrot.lane.b32.xlu0 %v805, 126
        %v1189 = vpop.permute.xlu0 %1188
        %1190 = vrot.lane.b32.xlu0 %v806, 126
        %v1191 = vpop.permute.xlu0 %1190
        %1192 = vrot.lane.b32.xlu0 %v807, 126
        %v1193 = vpop.permute.xlu0 %1192
        %1194 = vrot.lane.b32.xlu0 %v808, 126
        %v1195 = vpop.permute.xlu0 %1194
        %1196 = vrot.lane.b32.xlu0 %v809, 126
        %v1197 = vpop.permute.xlu0 %1196
        %1198 = vrot.lane.b32.xlu0 %v810, 126
        %v1199 = vpop.permute.xlu0 %1198
        %1200 = vrot.lane.b32.xlu0 %v811, 126
        %v1201 = vpop.permute.xlu0 %1200
        %1202 = vrot.lane.b32.xlu0 %v812, 126
        %v1203 = vpop.permute.xlu0 %1202
        %1204 = vrot.lane.b32.xlu0 %v813, 126
        %v1205 = vpop.permute.xlu0 %1204
        %1206 = vrot.lane.b32.xlu0 %v814, 126
        %v1207 = vpop.permute.xlu0 %1206
        %1208 = vrot.lane.b32.xlu0 %v815, 126
        %v1209 = vpop.permute.xlu0 %1208
        %1242 = vmatprep.subr.mxu0 0.0
        %1243 = vmatpush1.msra.mxu0 %v1147
        %1244 = vmatprep.subr.mxu0 0.0
        %1245 = vmatpush1.msra.mxu0 %v1149
        %1246 = vmatprep.subr.mxu0 0.0
        %1247 = vmatpush1.msra.mxu0 %v1151
        %1248 = vmatprep.subr.mxu0 0.0
        %1249 = vmatpush1.msra.mxu0 %v1153
        %1250 = vmatprep.subr.mxu0 0.0
        %1251 = vmatpush1.msra.mxu0 %v1155
        %1252 = vmatprep.subr.mxu0 0.0
        %1253 = vmatpush1.msra.mxu0 %v1157
        %1254 = vmatprep.subr.mxu0 0.0
        %1255 = vmatpush1.msra.mxu0 %v1159
        %1256 = vmatprep.subr.mxu0 0.0
        %1257 = vmatpush1.msra.mxu0 %v1161
        %1258 = vmatprep.subr.mxu0 0.0
        %1259 = vmatpush1.msra.mxu0 %v1163
        %1260 = vmatprep.subr.mxu0 0.0
        %1261 = vmatpush1.msra.mxu0 %v1165
        %1262 = vmatprep.subr.mxu0 0.0
        %1263 = vmatpush1.msra.mxu0 %v1167
        %1264 = vmatprep.subr.mxu0 0.0
        %1265 = vmatpush1.msra.mxu0 %v1169
        %1266 = vmatprep.subr.mxu0 0.0
        %1267 = vmatpush1.msra.mxu0 %v1171
        %1268 = vmatprep.subr.mxu0 0.0
        %1269 = vmatpush1.msra.mxu0 %v1173
        %1270 = vmatprep.subr.mxu0 0.0
        %1271 = vmatpush1.msra.mxu0 %v1175
        %1272 = vmatprep.subr.mxu0 0.0
        %1273 = vmatpush1.msra.mxu0 %v1177
        %1274 = vmatprep.subr.mxu0 0.0
        %1275 = vmatpush1.msra.mxu0 %v1179
        %1276 = vmatprep.subr.mxu0 0.0
        %1277 = vmatpush1.msra.mxu0 %v1181
        %1278 = vmatprep.subr.mxu0 0.0
        %1279 = vmatpush1.msra.mxu0 %v1183
        %1280 = vmatprep.subr.mxu0 0.0
        %1281 = vmatpush1.msra.mxu0 %v1185
        %1282 = vmatprep.subr.mxu0 0.0
        %1283 = vmatpush1.msra.mxu0 %v1187
        %1284 = vmatprep.subr.mxu0 0.0
        %1285 = vmatpush1.msra.mxu0 %v1189
        %1286 = vmatprep.subr.mxu0 0.0
        %1287 = vmatpush1.msra.mxu0 %v1191
        %1288 = vmatprep.subr.mxu0 0.0
        %1289 = vmatpush1.msra.mxu0 %v1193
        %1290 = vmatprep.subr.mxu0 0.0
        %1291 = vmatpush1.msra.mxu0 %v1195
        %1292 = vmatprep.subr.mxu0 0.0
        %1293 = vmatpush1.msra.mxu0 %v1197
        %1294 = vmatprep.subr.mxu0 0.0
        %1295 = vmatpush1.msra.mxu0 %v1199
        %1296 = vmatprep.subr.mxu0 0.0
        %1297 = vmatpush1.msra.mxu0 %v1201
        %1298 = vmatprep.subr.mxu0 0.0
        %1299 = vmatpush1.msra.mxu0 %v1203
        %1300 = vmatprep.subr.mxu0 0.0
        %1301 = vmatpush1.msra.mxu0 %v1205
        %1302 = vmatprep.subr.mxu0 0.0
        %1303 = vmatpush1.msra.mxu0 %v1207
        %1304 = vmatprep.subr.mxu0 0.0
        %1305 = vmatpush1.msra.mxu0 %v1209
        %1306 = vmatprep.mubr.f32.mxu0 %v1139
        %1307 = vmatmul.mubr.f32.gmra.mrb[0].mxu0 %v1138
        %v1308 = vpop.f32.mrb[0].mxu0
        %v1309 = vadd.f32 0.0, %v1308
        %v1310 = vpop.f32.mrb[0].mxu0
        %1311 = vmatprep.mubr.f32.mxu0 %v1141
        %1312 = vmatmul.mubr.f32.gmra.mrb[0].mxu0 %v1140
        %v1313 = vpop.f32.mrb[0].mxu0
        %v1314 = vadd.f32 0.0, %v1313
        %v1315 = vpop.f32.mrb[0].mxu0
        %1316 = vmatprep.mubr.f32.mxu0 %v1143
        %1317 = vmatmul.mubr.f32.gmra.mrb[0].mxu0 %v1142
        %v1318 = vpop.f32.mrb[0].mxu0
        %v1319 = vadd.f32 0.0, %v1318
        %v1320 = vpop.f32.mrb[0].mxu0
        %1321 = vmatprep.mubr.f32.mxu0 %v1145
        %1322 = vmatmul.mubr.f32.gmra.mrb[0].mxu0 %v1144
        %v1323 = vpop.f32.mrb[0].mxu0
        %v1324 = vadd.f32 0.0, %v1323
        %v1325 = vpop.f32.mrb[0].mxu0
        %1326 = vdwg.mxu0
        %v1327 = vadd.f32 %v1134, %v1309
        %v1328 = vadd.f32 %v1135, %v1314
        %v1329 = vadd.f32 %v1136, %v1319
        %v1330 = vadd.f32 %v1137, %v1324
        %s1331 = scalar_lea.vmem %s189, 32 [#allocation2]
        %1332 = vst.msk [vmem:[%s1331] sm:$0xff] %vm778, %v1327
        %1333 = vst.msk [vmem:[%s1331 + $0x8] sm:$0xff] %vm778, %v1328
        %1334 = vst.msk [vmem:[%s1331 + $0x10] sm:$0xff] %vm778, %v1329
        %1335 = vst.msk [vmem:[%s1331 + $0x18] sm:$0xff] %vm778, %v1330
        %s1336 = sand.u32 %s100, 1
        %s1337 = sand.u32 %s100, 1
        %s1338 = smul.addr %s1337, 64
        %s1339 = scalar_lea.vmem [#allocation2], %s1338
        // Predicated region
        $region33: #{tpu_custom_call.1} parent=31 // pred_check
          %p1340 = pneg %p110
        $region34: #{tpu_custom_call.1} parent=31 // pred_check_branch
          %1342 = sbr.rel (%p1340) target = $region36
        $region35: #{tpu_custom_call.1} parent=31 // pred_region
          %s1343 = smul.addr %s14, 4
          %s1344 = smul.addr %s1343, 8
          %s1345 = scalar_lea.vmem %s3, %s1344
          // Predicated region
          $region37: #{tpu_custom_call.1} parent=35 // pred_check
            _
          $region38: #{tpu_custom_call.1} parent=35 // pred_check_branch
            %1347 = sbr.rel (0) target = $region40
          $region39: #{tpu_custom_call.1} parent=35 // pred_region
            // Predicated region
            $region41: #{tpu_custom_call.1} parent=39 // pred_check
              _
            $region42: #{tpu_custom_call.1} parent=39 // pred_check_branch
              %1349 = sbr.rel (0) target = $region44
            $region43: #{tpu_custom_call.1} parent=39 // pred_region
              // Predicated region
              $region56: #{tpu_custom_call.1} parent=43 // pred_check
                _
              $region57: #{tpu_custom_call.1} parent=43 // pred_check_branch
                %1378 = sbr.rel (0) target = $region59
              $region58: #{tpu_custom_call.1} parent=43 // pred_region
                loop: start=0, step=1, limit=1
                $region60: #{tpu_custom_call.1} parent=58 // loop_pre_header
                  _
                $region61: #{tpu_custom_call.1} parent=58 // loop_header
                  %s1380 = sphi 0, %s1384
                  %p1381 = scmp.ge.s32.totalorder %s1380, 1
                  %s1385 = sphi %s1339, %s1339
                  %s1386 = sphi %s1345, %s1345
                $region62: #{tpu_custom_call.1} parent=58 // loop_header_branch
                  %1383 = sbr.rel (%p1381) target = $region66
                $region63: #{tpu_custom_call.1} parent=58 // loop_body
                  %v1387 = vld [vmem:[%s1385] sm:$0xff]
                  %1388 = vst [vmem:[%s1386] sm:$0xff] %v1387
                  %v1389 = vld [vmem:[%s1385 + $0x8] sm:$0xff]
                  %1390 = vst [vmem:[%s1386 + $0x8] sm:$0xff] %v1389
                  %v1391 = vld [vmem:[%s1385 + $0x10] sm:$0xff]
                  %1392 = vst [vmem:[%s1386 + $0x10] sm:$0xff] %v1391
                  %v1393 = vld [vmem:[%s1385 + $0x18] sm:$0xff]
                  %1394 = vst [vmem:[%s1386 + $0x18] sm:$0xff] %v1393
                  %v1395 = vld [vmem:[%s1385 + $0x20] sm:$0xff]
                  %1396 = vst [vmem:[%s1386 + $0xc0] sm:$0xff] %v1395
                  %v1397 = vld [vmem:[%s1385 + $0x28] sm:$0xff]
                  %1398 = vst [vmem:[%s1386 + $0xc8] sm:$0xff] %v1397
                  %v1399 = vld [vmem:[%s1385 + $0x30] sm:$0xff]
                  %1400 = vst [vmem:[%s1386 + $0xd0] sm:$0xff] %v1399
                  %v1401 = vld [vmem:[%s1385 + $0x38] sm:$0xff]
                  %1402 = vst [vmem:[%s1386 + $0xd8] sm:$0xff] %v1401
                $region64: #{tpu_custom_call.1} parent=58 // loop_footer
                  %s1384 = sadd.s32 1, %s1380
                $region65: #{tpu_custom_call.1} parent=58 // loop_footer_branch
                  %1379 = sbr.rel target = $region61
                $region66: #{tpu_custom_call.1} parent=58 // loop_exit
                  _
              $region59: #{tpu_custom_call.1} parent=43 // pred_fallthru
                _
              // Predicated region
              $region67: #{tpu_custom_call.1} parent=43 // pred_check
                _
              $region68: #{tpu_custom_call.1} parent=43 // pred_check_branch
                %1404 = sbr.rel target = $region70
              $region69: #{tpu_custom_call.1} parent=43 // pred_region
                _
              $region70: #{tpu_custom_call.1} parent=43 // pred_fallthru
                _
            $region44: #{tpu_custom_call.1} parent=39 // pred_fallthru
              _
            // Predicated region
            $region45: #{tpu_custom_call.1} parent=39 // pred_check
              _
            $region46: #{tpu_custom_call.1} parent=39 // pred_check_branch
              %1351 = sbr.rel target = $region48
            $region47: #{tpu_custom_call.1} parent=39 // pred_region
              loop: start=0, step=1, limit=1
              $region49: #{tpu_custom_call.1} parent=47 // loop_pre_header
                _
              $region50: #{tpu_custom_call.1} parent=47 // loop_header
                %s1354 = sphi 0, %s1358
                %p1355 = scmp.ge.s32.totalorder %s1354, 1
                %s1359 = sphi %s1339, %s1339
                %s1360 = sphi %s1345, %s1345
              $region51: #{tpu_custom_call.1} parent=47 // loop_header_branch
                %1357 = sbr.rel (%p1355) target = $region55
              $region52: #{tpu_custom_call.1} parent=47 // loop_body
                %v1361 = vld [vmem:[%s1359] sm:$0xff]
                %1362 = vst [vmem:[%s1360] sm:$0xff] %v1361
                %v1363 = vld [vmem:[%s1359 + $0x8] sm:$0xff]
                %1364 = vst [vmem:[%s1360 + $0x8] sm:$0xff] %v1363
                %v1365 = vld [vmem:[%s1359 + $0x10] sm:$0xff]
                %1366 = vst [vmem:[%s1360 + $0x10] sm:$0xff] %v1365
                %v1367 = vld [vmem:[%s1359 + $0x18] sm:$0xff]
                %1368 = vst [vmem:[%s1360 + $0x18] sm:$0xff] %v1367
                %v1369 = vld [vmem:[%s1359 + $0x20] sm:$0xff]
                %1370 = vst [vmem:[%s1360 + $0xc0] sm:$0xff] %v1369
                %v1371 = vld [vmem:[%s1359 + $0x28] sm:$0xff]
                %1372 = vst [vmem:[%s1360 + $0xc8] sm:$0xff] %v1371
                %v1373 = vld [vmem:[%s1359 + $0x30] sm:$0xff]
                %1374 = vst [vmem:[%s1360 + $0xd0] sm:$0xff] %v1373
                %v1375 = vld [vmem:[%s1359 + $0x38] sm:$0xff]
                %1376 = vst [vmem:[%s1360 + $0xd8] sm:$0xff] %v1375
              $region53: #{tpu_custom_call.1} parent=47 // loop_footer
                %s1358 = sadd.s32 1, %s1354
              $region54: #{tpu_custom_call.1} parent=47 // loop_footer_branch
                %1353 = sbr.rel target = $region50
              $region55: #{tpu_custom_call.1} parent=47 // loop_exit
                _
            $region48: #{tpu_custom_call.1} parent=39 // pred_fallthru
              _
          $region40: #{tpu_custom_call.1} parent=35 // pred_fallthru
            _
          %1405 = vnop
        $region36: #{tpu_custom_call.1} parent=31 // pred_fallthru
          _
      $region32: #{tpu_custom_call.1} parent=5 // pred_fallthru
        _
      %p1406 = scmp.le.s32.totalorder 2, %s9
      // Predicated region
      $region71: #{tpu_custom_call.1} parent=5 // pred_check
        %p1407 = pneg %p1406
      $region72: #{tpu_custom_call.1} parent=5 // pred_check_branch
        %1409 = sbr.rel (%p1407) target = $region74
      $region73: #{tpu_custom_call.1} parent=5 // pred_region
        %s1410 = ssub.s32 %s9, 2
        // Predicated region
        $region75: #{tpu_custom_call.1} parent=73 // pred_check
          %p1411 = pneg %p116
        $region76: #{tpu_custom_call.1} parent=73 // pred_check_branch
          %1413 = sbr.rel (%p1411) target = $region78
        $region77: #{tpu_custom_call.1} parent=73 // pred_region
          %s1414 = sand.u32 %s101, 1
          %s1415 = sand.u32 %s101, 1
          %s1416 = smul.addr %s1415, 64
          %s1417 = scalar_lea.vmem [#allocation2], %s1416
        $region78: #{tpu_custom_call.1} parent=73 // pred_fallthru
          _
      $region74: #{tpu_custom_call.1} parent=5 // pred_fallthru
        _
    $region6: #{tpu_custom_call.1} parent=1 // loop_footer
      %s13 = sadd.s32 1, %s9
    $region7: #{tpu_custom_call.1} parent=1 // loop_footer_branch
      %8 = sbr.rel target = $region3
    $region8: #{tpu_custom_call.1} parent=1 // loop_exit
      _

</llo_original>
